<compile_context>
chip_gen: v5e
topology: v5e:2x2
jax: 0.10.0
libtpu: 0.0.40
codegen_flags: <defaults>
</compile_context>

<pallas_src>
from typing import Any, Callable, Dict, Optional

import jax
import jax.numpy as jnp
from jax.experimental import pallas as pl
from jax.experimental.pallas import tpu as pltpu


def _round_up(x: int, m: int) -> int:
    return ((x + m - 1) // m) * m


def _cdiv(a: int, b: int) -> int:
    return (a + b - 1) // b


# ----------------------------------------------------------------------------
# Pallas kernel: tiled fused linear head  out[s] = partial(x_flat @ W) (+ b)
#   grid = (splits, n_tiles, k_per_split); K axis innermost (reduction),
#   splits/N axes "parallel" for megacore sharding.
# ----------------------------------------------------------------------------
def _linear_kernel(x_ref, w_ref, b_ref, o_ref):
    # x_ref: [B_pad, tk] bf16, w_ref: [tk, tn] bf16, b_ref: [1, tn] f32
    # o_ref: [B_pad, tn] f32 (leading split dim squeezed; VMEM resident over K)
    s = pl.program_id(0)
    k = pl.program_id(2)

    @pl.when(k == 0)
    def _init():
        o_ref[...] = jnp.zeros_like(o_ref)

    o_ref[...] += jnp.dot(
        x_ref[...], w_ref[...], preferred_element_type=jnp.float32
    )

    # Bias added exactly once: in split 0's finalize step.
    @pl.when((k == pl.num_programs(2) - 1) & (s == 0))
    def _bias():
        o_ref[...] += b_ref[...]


# ----------------------------------------------------------------------------
# One-time parameter preparation (padding + bf16 cast of the weight stream)
# ----------------------------------------------------------------------------
def prepare_linear_params(w: jax.Array, b: jax.Array,
                          *, tn: int = 256, tk: int = 1024) -> Dict[str, Any]:
    F, H = w.shape

    # N (output / lane) tiling: use tn>=256 when it divides H_pad cleanly
    # (v6e/v7x 256-wide MXU, >=512B contiguous DMA rows), else 128 (no waste).
    H_pad = _round_up(max(H, 128), 128)
    tn_eff = tn if (H_pad % tn == 0) else 128
    n_tiles = H_pad // tn_eff

    # K (reduction) tiling.  When n_tiles == 1 the N axis cannot feed v7x's
    # second TensorCore, so split the K reduction in two (partial sums).
    F_pad128 = _round_up(max(F, 128), 128)
    splits = 2 if (n_tiles == 1 and F_pad128 >= 256) else 1
    k_tiles = _cdiv(F_pad128, tk)
    if splits == 2:
        k_tiles = max(k_tiles, 2)
        k_tiles += k_tiles % 2          # even number of K tiles
    tk_eff = _round_up(_cdiv(F_pad128, k_tiles), 128)
    F_pad = tk_eff * k_tiles

    # Pad + cast ONCE (bf16 weight stream halves HBM bytes on the dominant
    # operand; zero padding contributes nothing to the result).
    w_p = jnp.zeros((F_pad, H_pad), jnp.bfloat16).at[:F, :H].set(
        w.astype(jnp.bfloat16))
    b_p = jnp.zeros((1, H_pad), jnp.float32).at[:, :H].set(
        jnp.asarray(b, jnp.float32).reshape(1, -1))

    return dict(w_p=w_p, b_p=b_p, F=F, H=H, F_pad=F_pad, H_pad=H_pad,
                tn=tn_eff, tk=tk_eff, n_tiles=n_tiles, k_tiles=k_tiles,
                splits=splits, k_per_split=k_tiles // splits)


# ----------------------------------------------------------------------------
# Per-call wrapper
# ----------------------------------------------------------------------------
def pallas_linear(x_flat: jax.Array, params: Dict[str, Any]) -> jax.Array:
    """out = x_flat @ W + b using pre-padded bf16 weights + f32 accumulation."""
    B, F = x_flat.shape
    assert F == params["F"], (F, params["F"])

    tn, tk = params["tn"], params["tk"]
    splits, k_per_split = params["splits"], params["k_per_split"]
    F_pad, H_pad = params["F_pad"], params["H_pad"]
    n_tiles = params["n_tiles"]

    # bf16 LHS packs two rows per sublane -> pad batch to a multiple of 16.
    B_pad = _round_up(max(B, 16), 16)
    if B == B_pad and F == F_pad:
        x_p = x_flat.astype(jnp.bfloat16)          # fast path: no pad copy
    else:
        x_p = jnp.zeros((B_pad, F_pad), jnp.bfloat16).at[:B, :F].set(
            x_flat.astype(jnp.bfloat16))

    grid = (splits, n_tiles, k_per_split)

    cost = pl.CostEstimate(
        flops=2 * B_pad * F_pad * H_pad,
        transcendentals=0,
        bytes_accessed=(n_tiles * x_p.size * 2          # x streamed per N tile
                        + params["w_p"].size * 2        # bf16 weights, read once
                        + params["b_p"].size * 4
                        + splits * B_pad * H_pad * 4),
    )

    out = pl.pallas_call(
        _linear_kernel,
        out_shape=jax.ShapeDtypeStruct((splits, B_pad, H_pad), jnp.float32),
        grid_spec=pltpu.PrefetchScalarGridSpec(
            num_scalar_prefetch=0,
            grid=grid,                                  # reduction (K) axis last
            in_specs=[
                # activations: K chunk of this split
                pl.BlockSpec((B_pad, tk),
                             lambda s, n, k: (0, s * k_per_split + k)),
                # weights: (K chunk, N tile)
                pl.BlockSpec((tk, tn),
                             lambda s, n, k: (s * k_per_split + k, n)),
                # bias: N tile only
                pl.BlockSpec((1, tn), lambda s, n, k: (0, n)),
            ],
            # per-split partial result; block index constant across K
            out_specs=pl.BlockSpec((None, B_pad, tn),
                                   lambda s, n, k: (s, 0, n)),
        ),
        compiler_params=pltpu.CompilerParams(
            # split & N axes parallel -> megacore sharding on v7x;
            # K axis is the sequential reduction.
            dimension_semantics=("parallel", "parallel", "arbitrary"),
            vmem_limit_bytes=48 * 1024 * 1024,   # fits v7x's 64 MiB VMEM
        ),
        cost_estimate=cost,
    )(x_p, params["w_p"], params["b_p"])

    # Combine per-split partial sums (cheap; splits is 1 or 2).
    out = out[0] if splits == 1 else out.sum(axis=0)
    return out[:B, :params["H"]]


# ----------------------------------------------------------------------------
# Synthetic "pretrained model": flatten NCHW -> linear head (Pallas matmul)
# ----------------------------------------------------------------------------
class SyntheticPretrainedModel:
    def __init__(self, in_features: int, hidden: int, key: jax.Array):
        kw, kb = jax.random.split(key)
        self.w = (jax.random.normal(kw, (in_features, hidden), jnp.float32)
                  * (1.0 / jnp.sqrt(in_features)))
        self.b = jax.random.normal(kb, (1, hidden), jnp.float32) * 0.01
        # Pad + cast the weight stream ONCE (not per forward call).
        self._params = prepare_linear_params(self.w, self.b)

    def __call__(self, x: jax.Array) -> jax.Array:
        B = x.shape[0]
        x_flat = x.reshape(B, -1).astype(jnp.float32)
        return pallas_linear(x_flat, self._params)

    def state_dict(self) -> Dict[str, Any]:
        return {"w": self.w, "b": self.b}


# ----------------------------------------------------------------------------
# JAX/Pallas port of PretrainedModelWrapper
# ----------------------------------------------------------------------------
class PretrainedModelWrapper:
    """Base wrapper for pretrained models providing a consistent interface."""

    def __init__(self, model_name: Optional[str] = None,
                 model: Optional[Callable[[jax.Array], jax.Array]] = None):
        self.model_name = model_name
        self.pretrained_model = model
        self.config: Dict[str, Any] = {}

    def load_model(self, model_name: str) -> None:
        # Abstract in the reference module.
        raise NotImplementedError

    def forward(self, x: jax.Array) -> jax.Array:
        # Abstract in the reference module; implemented by subclasses.
        raise NotImplementedError

    def __call__(self, x: jax.Array) -> jax.Array:
        return self.forward(x)

    # TODO(synk): save()/load() in the reference use torch.save / torch.load on
    # disk; no in-kernel equivalent — kept as in-memory dict stubs.
    def save(self, path: str) -> Dict[str, Any]:
        return {
            "model_name": self.model_name,
            "config": self.config,
            "model_state_dict": self.pretrained_model.state_dict()
            if self.pretrained_model is not None else {},
        }

    def load(self, checkpoint: Dict[str, Any],
             map_location: Optional[str] = None) -> Dict[str, Any]:
        self.model_name = checkpoint.get("model_name", self.model_name)
        self.config = checkpoint.get("config", {})
        return checkpoint


class SyntheticLinearWrapper(PretrainedModelWrapper):
    """Concrete subclass: delegates forward() to the wrapped synthetic model."""

    def forward(self, x: jax.Array) -> jax.Array:
        if self.pretrained_model is None:
            raise NotImplementedError("no pretrained model attached")
        return self.pretrained_model(x)


# ----------------------------------------------------------------------------
# Demo
# ----------------------------------------------------------------------------
if __name__ == "__main__":
    key = jax.random.PRNGKey(0)
    kx, km = jax.random.split(key)

    B, C, Himg, Wimg = 2, 4, 16, 16     # NCHW, same convention as PyTorch
    hidden = 32
    x = jax.random.normal(kx, (B, C, Himg, Wimg), jnp.float32)

    model = SyntheticPretrainedModel(in_features=C * Himg * Wimg,
                                     hidden=hidden, key=km)
    wrapper = SyntheticLinearWrapper(model_name="synthetic_linear", model=model)

    out = wrapper(x)
    out = jax.block_until_ready(out)
    assert out.shape == (B, hidden), out.shape

    # correctness checks (bf16 input rounding is the deliberate tradeoff)
    x_flat = x.reshape(B, -1)
    ref_bf16 = jnp.dot(x_flat.astype(jnp.bfloat16),
                       model.w.astype(jnp.bfloat16),
                       preferred_element_type=jnp.float32) + model.b
    ref_f32 = x_flat @ model.w + model.b
    assert jnp.allclose(out, ref_bf16, atol=1e-2, rtol=1e-2)
    assert jnp.allclose(out, ref_f32, atol=5e-2, rtol=5e-2)

    print("KERNEL_OK")
</pallas_src>

<mosaic_0001>
module attributes {stable_mosaic.version = 11 : i64} {
  func.func @_linear_kernel(%arg0: i32, %arg1: i32, %arg2: i32, %arg3: memref<16x512xbf16, #tpu.memory_space<vmem>>, %arg4: memref<512x128xbf16, #tpu.memory_space<vmem>>, %arg5: memref<1x128xf32, #tpu.memory_space<vmem>>, %arg6: memref<1x16x128xf32, #tpu.memory_space<vmem>>) attributes {dimension_semantics = [#tpu.dimension_semantics<parallel>, #tpu.dimension_semantics<parallel>, #tpu.dimension_semantics<arbitrary>], iteration_bounds = array<i64: 2, 1, 1>, scalar_prefetch = 0 : i64, scratch_operands = 0 : i64, tpu.core_type = #tpu.core_type<tc>, window_params = [{transform_indices = @transform_0, window_bounds = array<i64: 16, 512>}, {transform_indices = @transform_1, window_bounds = array<i64: 512, 128>}, {transform_indices = @transform_2, window_bounds = array<i64: 1, 128>}, {transform_indices = @transform_3, window_bounds = array<i64: 1, 16, 128>}]} {
    %c0_i32 = arith.constant 0 : i32
    %0 = arith.cmpi eq, %arg2, %c0_i32 : i32
    %1 = arith.extui %0 : i1 to i32
    %c0_i32_0 = arith.constant 0 : i32
    %2 = arith.cmpi ne, %1, %c0_i32_0 : i32
    scf.if %2 {
      %cst_13 = arith.constant 0.000000e+00 : f32
      %17 = vector.broadcast %cst_13 : f32 to vector<16x128xf32>
      %c0_14 = arith.constant 0 : index
      %c0_15 = arith.constant 0 : index
      %c0_16 = arith.constant 0 : index
      %18 = vector.load %arg6[%c0_14, %c0_15, %c0_16] : memref<1x16x128xf32, #tpu.memory_space<vmem>>, vector<1x16x128xf32>
      %19 = vector.shape_cast %18 : vector<1x16x128xf32> to vector<16x128xf32>
      %20 = vector.shape_cast %17 : vector<16x128xf32> to vector<1x16x128xf32>
      tpu.vector_store %arg6[%c0_14, %c0_15, %c0_16], %20 {strides = array<i32>} : memref<1x16x128xf32, #tpu.memory_space<vmem>>, vector<1x16x128xf32>,
    } else {
    }
    %c0 = arith.constant 0 : index
    %c0_1 = arith.constant 0 : index
    %c0_2 = arith.constant 0 : index
    %3 = vector.load %arg6[%c0, %c0_1, %c0_2] : memref<1x16x128xf32, #tpu.memory_space<vmem>>, vector<1x16x128xf32>
    %4 = vector.shape_cast %3 : vector<1x16x128xf32> to vector<16x128xf32>
    %c0_3 = arith.constant 0 : index
    %c0_4 = arith.constant 0 : index
    %5 = vector.load %arg3[%c0_3, %c0_4] : memref<16x512xbf16, #tpu.memory_space<vmem>>, vector<16x512xbf16>
    %c0_5 = arith.constant 0 : index
    %c0_6 = arith.constant 0 : index
    %6 = vector.load %arg4[%c0_5, %c0_6] : memref<512x128xbf16, #tpu.memory_space<vmem>>, vector<512x128xbf16>
    %cst = arith.constant dense<0.000000e+00> : vector<16x128xf32>
    %7 = tpu.matmul %5, %6, %cst {dimension_numbers = #tpu.dot_dimension_numbers<[1], [0], [0], [1], [0, 0, 1, 1], [], []>} : vector<16x512xbf16>, vector<512x128xbf16>, vector<16x128xf32> -> vector<16x128xf32>
    %8 = arith.addf %4, %7 : vector<16x128xf32>
    %c0_7 = arith.constant 0 : index
    %c0_8 = arith.constant 0 : index
    %c0_9 = arith.constant 0 : index
    %9 = vector.load %arg6[%c0_7, %c0_8, %c0_9] : memref<1x16x128xf32, #tpu.memory_space<vmem>>, vector<1x16x128xf32>
    %10 = vector.shape_cast %9 : vector<1x16x128xf32> to vector<16x128xf32>
    %11 = vector.shape_cast %8 : vector<16x128xf32> to vector<1x16x128xf32>
    tpu.vector_store %arg6[%c0_7, %c0_8, %c0_9], %11 {strides = array<i32>} : memref<1x16x128xf32, #tpu.memory_space<vmem>>, vector<1x16x128xf32>,
    %c0_i32_10 = arith.constant 0 : i32
    %12 = arith.cmpi eq, %arg2, %c0_i32_10 : i32
    %c0_i32_11 = arith.constant 0 : i32
    %13 = arith.cmpi eq, %arg0, %c0_i32_11 : i32
    %14 = arith.andi %12, %13 : i1
    %15 = arith.extui %14 : i1 to i32
    %c0_i32_12 = arith.constant 0 : i32
    %16 = arith.cmpi ne, %15, %c0_i32_12 : i32
    scf.if %16 {
      %c0_13 = arith.constant 0 : index
      %c0_14 = arith.constant 0 : index
      %c0_15 = arith.constant 0 : index
      %17 = vector.load %arg6[%c0_13, %c0_14, %c0_15] : memref<1x16x128xf32, #tpu.memory_space<vmem>>, vector<1x16x128xf32>
      %18 = vector.shape_cast %17 : vector<1x16x128xf32> to vector<16x128xf32>
      %c0_16 = arith.constant 0 : index
      %c0_17 = arith.constant 0 : index
      %19 = vector.load %arg5[%c0_16, %c0_17] : memref<1x128xf32, #tpu.memory_space<vmem>>, vector<1x128xf32>
      %20 = vector.broadcast %19 : vector<1x128xf32> to vector<16x128xf32>
      %21 = arith.addf %18, %20 : vector<16x128xf32>
      %c0_18 = arith.constant 0 : index
      %c0_19 = arith.constant 0 : index
      %c0_20 = arith.constant 0 : index
      %22 = vector.load %arg6[%c0_18, %c0_19, %c0_20] : memref<1x16x128xf32, #tpu.memory_space<vmem>>, vector<1x16x128xf32>
      %23 = vector.shape_cast %22 : vector<1x16x128xf32> to vector<16x128xf32>
      %24 = vector.shape_cast %21 : vector<16x128xf32> to vector<1x16x128xf32>
      tpu.vector_store %arg6[%c0_18, %c0_19, %c0_20], %24 {strides = array<i32>} : memref<1x16x128xf32, #tpu.memory_space<vmem>>, vector<1x16x128xf32>,
    } else {
    }
    return
  }
  func.func @transform_0(%arg0: i32, %arg1: i32, %arg2: i32) -> (i32, i32) {
    %c1_i32 = arith.constant 1 : i32
    %0 = arith.muli %arg0, %c1_i32 : i32
    %1 = arith.addi %0, %arg2 : i32
    %c0_i32 = arith.constant 0 : i32
    %c0_i32_0 = arith.constant 0 : i32
    return %c0_i32, %1 : i32, i32
  }
  func.func @transform_1(%arg0: i32, %arg1: i32, %arg2: i32) -> (i32, i32) {
    %c1_i32 = arith.constant 1 : i32
    %0 = arith.muli %arg0, %c1_i32 : i32
    %1 = arith.addi %0, %arg2 : i32
    %c0_i32 = arith.constant 0 : i32
    return %1, %arg1 : i32, i32
  }
  func.func @transform_2(%arg0: i32, %arg1: i32, %arg2: i32) -> (i32, i32) {
    %c0_i32 = arith.constant 0 : i32
    %c0_i32_0 = arith.constant 0 : i32
    return %c0_i32, %arg1 : i32, i32
  }
  func.func @transform_3(%arg0: i32, %arg1: i32, %arg2: i32) -> (i32, i32, i32) {
    %c0_i32 = arith.constant 0 : i32
    %c0_i32_0 = arith.constant 0 : i32
    return %arg0, %c0_i32, %arg1 : i32, i32, i32
  }
}

</mosaic_0001>

<llo_original>
// kernel: tpu_custom_call.1
$region0: #{tpu_custom_call.1}
  #allocation0 [shape = 'u32[]', space=smem, size = 0x4, offset = 0x4, fixed_abs, tag = 'smem constant byte address 0x4 - core index']
  #allocation1 [shape = 'u32[72,128]{1,0:T(1,128)}', space=vmem, size = 0x9000, scoped, tag = 'internal scratch']
  %s0 = inlined_call_operand.hbm [shape: bf16[16,1024], index: 0, kind: input, shape index: {}]
  %s1 = inlined_call_operand.hbm [shape: bf16[1024,128], index: 1, kind: input, shape index: {}]
  %s2 = inlined_call_operand.vmem [shape: f32[1,128], index: 2, kind: input, shape index: {}]
  %s3 = inlined_call_operand.hbm [shape: f32[2,16,128], index: 3, kind: output, shape index: {}]
  %s4 = sld [smem:[#allocation0]]
  $region61: #{tpu_custom_call.1} parent=0
    _
  %s6 = ssub.s32 1, %s4
  %s7 = scalar_select 0, %s6, %s4
  $region1: #{tpu_custom_call.1} parent=0
    #allocation2 [shape = 'u8[32768]{0}', space=vmem, size = 0x8000, scoped, tag = 'input window, operand 0']
    #allocation3 [shape = 's32[2]{0}', space=sflag, size = 0x8, scoped, tag = 'scoped memory for tpu_custom_call.1']
    #allocation4 [shape = 's32[2]{0}', space=sflag, size = 0x8, scoped, tag = 'scoped memory for tpu_custom_call.1']
    #allocation5 [shape = 'u8[262144]{0}', space=vmem, size = 0x40000, scoped, tag = 'input window, operand 1']
    #allocation6 [shape = 's32[2]{0}', space=sflag, size = 0x8, scoped, tag = 'scoped memory for tpu_custom_call.1']
    #allocation7 [shape = 'u8[16384]{0}', space=vmem, size = 0x4000, scoped, tag = 'output window, operand 0']
    %8 = vsyncpa [#allocation3], 0
    %s9 = scalar_lea.sflag [#allocation3], 1
    %10 = vsyncpa %s9, 0
    %11 = vsyncpa [#allocation6], 0
    %s12 = scalar_lea.sflag [#allocation6], 1
    %13 = vsyncpa %s12, 0
    %14 = vsyncpa [#allocation4], 0
    %s15 = scalar_lea.sflag [#allocation4], 1
    %16 = vsyncpa %s15, 0
    loop: start=0, step=1, limit=4
    $region2: #{tpu_custom_call.1} parent=1 // loop_pre_header
      _
    $region3: #{tpu_custom_call.1} parent=1 // loop_header
      %s18 = sphi 0, %s22
      %p19 = scmp.ge.s32.totalorder %s18, 4
      %s25 = sphi 0, %s44
      %s26 = sphi 0, %s40
      %s27 = sphi 0, %s36
      %s28 = sphi 0, %s25
      %s29 = sphi 0, %s26
      %s30 = sphi 0, %s27
      %s31 = sphi 0, %s28
      %s32 = sphi 0, %s29
      %s33 = sphi 0, %s30
      %s49 = sphi 0, %s51
      %s52 = sphi 0, %s49
      %s53 = sphi 0, %s52
      %s69 = sphi 0, %s53
      %s79 = sphi 0, %s81
      %s82 = sphi 0, %s79
      %s83 = sphi 0, %s82
      %s99 = sphi 0, %s83
      %s105 = sphi 0, %s107
      %s108 = sphi 0, %s105
      %s109 = sphi 0, %s108
      %s125 = sphi 0, %s109
      %s133 = sphi 0, %s135
      %s136 = sphi 0, %s133
      %s137 = sphi 0, %s136
      %s153 = sphi 0, %s137
    $region4: #{tpu_custom_call.1} parent=1 // loop_header_branch
      %21 = sbr.rel (%p19) target = $region8
    $region5: #{tpu_custom_call.1} parent=1 // loop_body
      %s23 = ssub.s32 %s18, 1
      %s24 = ssub.s32 %s18, 2
      %s34 = sadd.s32 1, %s27
      %p35 = scmp.ge.s32.totalorder %s34, 1
      %s36 = scalar_select %p35, 0, %s34
      %s37 = sadd.s32 1, %s26
      %s38 = scalar_select %p35, %s37, %s26
      %p39 = scmp.ge.s32.totalorder %s38, 1
      %s40 = scalar_select %p39, 0, %s38
      %s41 = sadd.s32 1, %s25
      %s42 = scalar_select %p39, %s41, %s25
      %p43 = scmp.ge.s32.totalorder %s42, 2
      %s44 = scalar_select %p43, 0, %s42
      %s45 = sadd.s32 %s25, %s27
      %s46 = sadd.s32 %s44, %s36
      %s47 = ssub.s32 %s45, %s46
      %p48 = scmp.eq.s32.totalorder %s47, 0
      %s50 = sadd.s32 %s49, 1
      %s51 = scalar_select %p48, %s49, %s50
      %p54 = pneg %p48
      %p55 = scmp.eq.s32.totalorder %s18, 1
      %p56 = por %p54, %p55
      %p57 = scmp.ne.s32.totalorder %s49, %s52
      %p58 = scmp.eq.s32.totalorder %s18, 0
      %p59 = por %p57, %p58
      %p60 = scmp.ne.s32.totalorder %s49, %s52
      %p61 = scmp.eq.s32.totalorder %s23, 1
      %p62 = por %p60, %p61
      %p63 = scmp.ne.s32.totalorder %s52, %s53
      %p64 = scmp.eq.s32.totalorder %s23, 0
      %p65 = por %p63, %p64
      %p66 = scmp.ne.s32.totalorder %s52, %s53
      %p67 = scmp.eq.s32.totalorder %s24, 1
      %p68 = por %p66, %p67
      %p70 = scmp.ne.s32.totalorder %s53, %s69
      %p71 = scmp.eq.s32.totalorder %s24, 0
      %p72 = por %p70, %p71
      %s73 = sadd.s32 %s25, %s27
      %s74 = sadd.s32 %s44, %s36
      %s75 = ssub.s32 %s73, %s74
      %s76 = ssub.s32 %s26, %s40
      %s77 = sor.u32 %s75, %s76
      %p78 = scmp.eq.s32.totalorder %s77, 0
      %s80 = sadd.s32 %s79, 1
      %s81 = scalar_select %p78, %s79, %s80
      %p84 = pneg %p78
      %p85 = scmp.eq.s32.totalorder %s18, 1
      %p86 = por %p84, %p85
      %p87 = scmp.ne.s32.totalorder %s79, %s82
      %p88 = scmp.eq.s32.totalorder %s18, 0
      %p89 = por %p87, %p88
      %p90 = scmp.ne.s32.totalorder %s79, %s82
      %p91 = scmp.eq.s32.totalorder %s23, 1
      %p92 = por %p90, %p91
      %p93 = scmp.ne.s32.totalorder %s82, %s83
      %p94 = scmp.eq.s32.totalorder %s23, 0
      %p95 = por %p93, %p94
      %p96 = scmp.ne.s32.totalorder %s82, %s83
      %p97 = scmp.eq.s32.totalorder %s24, 1
      %p98 = por %p96, %p97
      %p100 = scmp.ne.s32.totalorder %s83, %s99
      %p101 = scmp.eq.s32.totalorder %s24, 0
      %p102 = por %p100, %p101
      %s103 = ssub.s32 %s26, %s40
      %p104 = scmp.eq.s32.totalorder %s103, 0
      %s106 = sadd.s32 %s105, 1
      %s107 = scalar_select %p104, %s105, %s106
      %p110 = pneg %p104
      %p111 = scmp.eq.s32.totalorder %s18, 1
      %p112 = por %p110, %p111
      %p113 = scmp.ne.s32.totalorder %s105, %s108
      %p114 = scmp.eq.s32.totalorder %s18, 0
      %p115 = por %p113, %p114
      %p116 = scmp.ne.s32.totalorder %s105, %s108
      %p117 = scmp.eq.s32.totalorder %s23, 1
      %p118 = por %p116, %p117
      %p119 = scmp.ne.s32.totalorder %s108, %s109
      %p120 = scmp.eq.s32.totalorder %s23, 0
      %p121 = por %p119, %p120
      %p122 = scmp.ne.s32.totalorder %s108, %s109
      %p123 = scmp.eq.s32.totalorder %s24, 1
      %p124 = por %p122, %p123
      %p126 = scmp.ne.s32.totalorder %s109, %s125
      %p127 = scmp.eq.s32.totalorder %s24, 0
      %p128 = por %p126, %p127
      %s129 = ssub.s32 %s25, %s44
      %s130 = ssub.s32 %s26, %s40
      %s131 = sor.u32 %s129, %s130
      %p132 = scmp.eq.s32.totalorder %s131, 0
      %s134 = sadd.s32 %s133, 1
      %s135 = scalar_select %p132, %s133, %s134
      %p138 = pneg %p132
      %p139 = scmp.eq.s32.totalorder %s18, 1
      %p140 = por %p138, %p139
      %p141 = scmp.ne.s32.totalorder %s133, %s136
      %p142 = scmp.eq.s32.totalorder %s18, 0
      %p143 = por %p141, %p142
      %p144 = scmp.ne.s32.totalorder %s133, %s136
      %p145 = scmp.eq.s32.totalorder %s23, 1
      %p146 = por %p144, %p145
      %p147 = scmp.ne.s32.totalorder %s136, %s137
      %p148 = scmp.eq.s32.totalorder %s23, 0
      %p149 = por %p147, %p148
      %p150 = scmp.ne.s32.totalorder %s136, %s137
      %p151 = scmp.eq.s32.totalorder %s24, 1
      %p152 = por %p150, %p151
      %p154 = scmp.ne.s32.totalorder %s137, %s153
      %p155 = scmp.eq.s32.totalorder %s24, 0
      %p156 = por %p154, %p155
      %p157 = scmp.le.s32.totalorder 1, %s18
      %p158 = scmp.lt.s32.totalorder %s18, 3
      %p159 = pnand %p157, %p158
      %p160 = pneg %p159
      // Predicated region
      $region9: #{tpu_custom_call.1} parent=5 // pred_check
        _
      $region10: #{tpu_custom_call.1} parent=5 // pred_check_branch
        %162 = sbr.rel (%p159) target = $region12
      $region11: #{tpu_custom_call.1} parent=5 // pred_region
        %s163 = ssub.s32 %s18, 1
        // Predicated region
        $region13: #{tpu_custom_call.1} parent=11 // pred_check
          %p164 = pneg %p121
        $region14: #{tpu_custom_call.1} parent=11 // pred_check_branch
          %166 = sbr.rel (%p164) target = $region16
        $region15: #{tpu_custom_call.1} parent=11 // pred_region
          %p167 = scmp.lt.s32.totalorder %s29, 0
          %s168 = scalar_select %p167, %s29, 0
          %s169 = scalar_lea.vmem %s2, %s168
        $region16: #{tpu_custom_call.1} parent=11 // pred_fallthru
          _
      $region12: #{tpu_custom_call.1} parent=5 // pred_fallthru
        _
      %p170 = scmp.lt.s32.totalorder %s18, 2
      // Predicated region
      $region17: #{tpu_custom_call.1} parent=5 // pred_check
        %p171 = pneg %p170
      $region18: #{tpu_custom_call.1} parent=5 // pred_check_branch
        %173 = sbr.rel (%p171) target = $region20
      $region19: #{tpu_custom_call.1} parent=5 // pred_region
        // Predicated region
        $region21: #{tpu_custom_call.1} parent=19 // pred_check
          %p174 = pneg %p59
        $region22: #{tpu_custom_call.1} parent=19 // pred_check_branch
          %176 = sbr.rel (%p174) target = $region24
        $region23: #{tpu_custom_call.1} parent=19 // pred_region
          %s177 = sand.u32 %s49, 1
          %s178 = scalar_lea.sflag [#allocation3], %s177
          %s179 = sand.u32 %s49, 1
          %s180 = smul.addr %s179, 32
          %s181 = scalar_lea.vmem [#allocation2], %s180
          %s182 = sadd.s32 %s25, %s27
          %s183 = smul.u32 4, %s182
          %185 = vsyncadd %s178, 0
          %s186 = smul.addr %s183, 4
          %s187 = scalar_lea.hbm %s0, %s186
          %s188 = sshll.u32 %s187, 4
          %s189 = int_to_ptr.hbm [resolvable:$true] %s188
          %s190 = sshll.u32 %s181, 4
          %s191 = int_to_ptr.vmem [resolvable:$true] %s190
          %196 = dma.hbm_to_vmem [thread:$0]  %s189, 512, %s191, %s178, 512, 256, 16
        $region24: #{tpu_custom_call.1} parent=19 // pred_fallthru
          _
        // Predicated region
        $region25: #{tpu_custom_call.1} parent=19 // pred_check
          %p197 = pneg %p89
        $region26: #{tpu_custom_call.1} parent=19 // pred_check_branch
          %199 = sbr.rel (%p197) target = $region28
        $region27: #{tpu_custom_call.1} parent=19 // pred_region
          %s200 = sand.u32 %s79, 1
          %s201 = scalar_lea.sflag [#allocation6], %s200
          %s202 = sand.u32 %s79, 1
          %s203 = smul.addr %s202, 256
          %s204 = scalar_lea.vmem [#allocation5], %s203
          %s205 = sadd.s32 %s25, %s27
          %s206 = smul.u32 64, %s205
          %208 = vsyncadd %s201, 0
          %s209 = sadd.s32 %s26, %s206
          %s210 = smul.addr %s209, 4
          %s211 = scalar_lea.hbm %s1, %s210
          %s212 = sshll.u32 %s211, 4
          %s213 = int_to_ptr.hbm [resolvable:$true] %s212
          %s214 = sshll.u32 %s204, 4
          %s215 = int_to_ptr.vmem [resolvable:$true] %s214
          %220 = dma.hbm_to_vmem [thread:$0]  %s213, 4096, %s215, %s201, 64, 64, 4
        $region28: #{tpu_custom_call.1} parent=19 // pred_fallthru
          _
      $region20: #{tpu_custom_call.1} parent=5 // pred_fallthru
        _
      %p221 = scmp.le.s32.totalorder 1, %s18
      %p222 = scmp.lt.s32.totalorder %s18, 3
      %p223 = pnand %p221, %p222
      %p224 = pneg %p223
      // Predicated region
      $region29: #{tpu_custom_call.1} parent=5 // pred_check
        _
      $region30: #{tpu_custom_call.1} parent=5 // pred_check_branch
        %226 = sbr.rel (%p223) target = $region32
      $region31: #{tpu_custom_call.1} parent=5 // pred_region
        %s227 = ssub.s32 %s18, 1
        %s228 = sand.u32 %s52, 1
        %s229 = scalar_lea.sflag [#allocation3], %s228
        %s230 = sand.u32 %s52, 1
        %s231 = smul.addr %s230, 32
        %s232 = scalar_lea.vmem [#allocation2], %s231
        // Predicated region
        $region33: #{tpu_custom_call.1} parent=31 // pred_check
          %p233 = pneg %p65
        $region34: #{tpu_custom_call.1} parent=31 // pred_check_branch
          %235 = sbr.rel (%p233) target = $region36
        $region35: #{tpu_custom_call.1} parent=31 // pred_region
          %237 = dma.done %s229, 512
        $region36: #{tpu_custom_call.1} parent=31 // pred_fallthru
          _
        %s238 = sand.u32 %s82, 1
        %s239 = scalar_lea.sflag [#allocation6], %s238
        %s240 = sand.u32 %s82, 1
        %s241 = smul.addr %s240, 256
        %s242 = scalar_lea.vmem [#allocation5], %s241
        // Predicated region
        $region37: #{tpu_custom_call.1} parent=31 // pred_check
          %p243 = pneg %p95
        $region38: #{tpu_custom_call.1} parent=31 // pred_check_branch
          %245 = sbr.rel (%p243) target = $region40
        $region39: #{tpu_custom_call.1} parent=31 // pred_region
          %247 = dma.done %s239, 4096
        $region40: #{tpu_custom_call.1} parent=31 // pred_fallthru
          _
        %s248 = sand.u32 %s52, 1
        %s249 = scalar_lea.sflag [#allocation3], %s248
        %s250 = sand.u32 %s52, 1
        %s251 = smul.addr %s250, 32
        %s252 = scalar_lea.vmem [#allocation2], %s251
        %p253 = pneg %p65
        %p254 = pneg %p62
        %s255 = sand.u32 %s82, 1
        %s256 = scalar_lea.sflag [#allocation6], %s255
        %s257 = sand.u32 %s82, 1
        %s258 = smul.addr %s257, 256
        %s259 = scalar_lea.vmem [#allocation5], %s258
        %p260 = pneg %p95
        %p261 = pneg %p92
        %p262 = scmp.lt.s32.totalorder %s29, 0
        %s263 = scalar_select %p262, %s29, 0
        %s264 = scalar_lea.vmem %s2, %s263
        %p265 = pneg %p121
        %p266 = pneg %p118
        %p267 = pneg %p149
        %p268 = pneg %p146
        %s269 = sand.u32 %s136, 1
        %s270 = scalar_lea.sflag [#allocation4], %s269
        %s271 = sand.u32 %s136, 1
        %s272 = smul.addr %s271, 16
        %s273 = scalar_lea.vmem [#allocation7], %s272
        %s274 = sadd.s32 %s28, %s30
        %s275 = smul.u32 4, %s274
        %s276 = sadd.s32 %s28, %s30
        %s277 = smul.u32 64, %s276
        %p278 = scmp.lt.s32.totalorder %s29, 0
        %s279 = scalar_select %p278, %s29, 0
        %s280 = scalar_lea.vmem %s2, %s279
        %p281 = scmp.eq.s32.totalorder %s30, 0
        // Predicated region
        $region41: #{tpu_custom_call.1} parent=31 // pred_check
          %p282 = pneg %p281
        $region42: #{tpu_custom_call.1} parent=31 // pred_check_branch
          %284 = sbr.rel (%p282) target = $region44
        $region43: #{tpu_custom_call.1} parent=31 // pred_region
          %285 = vst [vmem:[%s273] sm:$0xff] 0.0
          %286 = vst [vmem:[%s273 + $0x8] sm:$0xff] 0.0
        $region44: #{tpu_custom_call.1} parent=31 // pred_fallthru
          _
        %v287 = vld [vmem:[%s273] sm:$0xff]
        %v288 = vld [vmem:[%s273 + $0x8] sm:$0xff]
        %v289 = vld [vmem:[%s232] sm:$0xff]
        %v290 = vld [vmem:[%s232 + $0x8] sm:$0xff]
        %v291 = vld [vmem:[%s232 + $0x10] sm:$0xff]
        %v292 = vld [vmem:[%s232 + $0x18] sm:$0xff]
        %v293 = vld [vmem:[%s242] sm:$0xf]
        %v294 = vld [vmem:[%s242 + $0x4] sm:$0xf]
        %v295 = vld [vmem:[%s242 + $0x8] sm:$0xf]
        %v296 = vld [vmem:[%s242 + $0xc] sm:$0xf]
        %v297 = vld [vmem:[%s242 + $0x10] sm:$0xf]
        %v298 = vld [vmem:[%s242 + $0x14] sm:$0xf]
        %v299 = vld [vmem:[%s242 + $0x18] sm:$0xf]
        %v300 = vld [vmem:[%s242 + $0x1c] sm:$0xf]
        %v301 = vld [vmem:[%s242 + $0x20] sm:$0xf]
        %v302 = vld [vmem:[%s242 + $0x24] sm:$0xf]
        %v303 = vld [vmem:[%s242 + $0x28] sm:$0xf]
        %v304 = vld [vmem:[%s242 + $0x2c] sm:$0xf]
        %v305 = vld [vmem:[%s242 + $0x30] sm:$0xf]
        %v306 = vld [vmem:[%s242 + $0x34] sm:$0xf]
        %v307 = vld [vmem:[%s242 + $0x38] sm:$0xf]
        %v308 = vld [vmem:[%s242 + $0x3c] sm:$0xf]
        %v309 = vld [vmem:[%s242 + $0x40] sm:$0xf]
        %v310 = vld [vmem:[%s242 + $0x44] sm:$0xf]
        %v311 = vld [vmem:[%s242 + $0x48] sm:$0xf]
        %v312 = vld [vmem:[%s242 + $0x4c] sm:$0xf]
        %v313 = vld [vmem:[%s242 + $0x50] sm:$0xf]
        %v314 = vld [vmem:[%s242 + $0x54] sm:$0xf]
        %v315 = vld [vmem:[%s242 + $0x58] sm:$0xf]
        %v316 = vld [vmem:[%s242 + $0x5c] sm:$0xf]
        %v317 = vld [vmem:[%s242 + $0x60] sm:$0xf]
        %v318 = vld [vmem:[%s242 + $0x64] sm:$0xf]
        %v319 = vld [vmem:[%s242 + $0x68] sm:$0xf]
        %v320 = vld [vmem:[%s242 + $0x6c] sm:$0xf]
        %v321 = vld [vmem:[%s242 + $0x70] sm:$0xf]
        %v322 = vld [vmem:[%s242 + $0x74] sm:$0xf]
        %v323 = vld [vmem:[%s242 + $0x78] sm:$0xf]
        %v324 = vld [vmem:[%s242 + $0x7c] sm:$0xf]
        %v325 = vld [vmem:[%s242 + $0x80] sm:$0xf]
        %v326 = vld [vmem:[%s242 + $0x84] sm:$0xf]
        %v327 = vld [vmem:[%s242 + $0x88] sm:$0xf]
        %v328 = vld [vmem:[%s242 + $0x8c] sm:$0xf]
        %v329 = vld [vmem:[%s242 + $0x90] sm:$0xf]
        %v330 = vld [vmem:[%s242 + $0x94] sm:$0xf]
        %v331 = vld [vmem:[%s242 + $0x98] sm:$0xf]
        %v332 = vld [vmem:[%s242 + $0x9c] sm:$0xf]
        %v333 = vld [vmem:[%s242 + $0xa0] sm:$0xf]
        %v334 = vld [vmem:[%s242 + $0xa4] sm:$0xf]
        %v335 = vld [vmem:[%s242 + $0xa8] sm:$0xf]
        %v336 = vld [vmem:[%s242 + $0xac] sm:$0xf]
        %v337 = vld [vmem:[%s242 + $0xb0] sm:$0xf]
        %v338 = vld [vmem:[%s242 + $0xb4] sm:$0xf]
        %v339 = vld [vmem:[%s242 + $0xb8] sm:$0xf]
        %v340 = vld [vmem:[%s242 + $0xbc] sm:$0xf]
        %v341 = vld [vmem:[%s242 + $0xc0] sm:$0xf]
        %v342 = vld [vmem:[%s242 + $0xc4] sm:$0xf]
        %v343 = vld [vmem:[%s242 + $0xc8] sm:$0xf]
        %v344 = vld [vmem:[%s242 + $0xcc] sm:$0xf]
        %v345 = vld [vmem:[%s242 + $0xd0] sm:$0xf]
        %v346 = vld [vmem:[%s242 + $0xd4] sm:$0xf]
        %v347 = vld [vmem:[%s242 + $0xd8] sm:$0xf]
        %v348 = vld [vmem:[%s242 + $0xdc] sm:$0xf]
        %v349 = vld [vmem:[%s242 + $0xe0] sm:$0xf]
        %v350 = vld [vmem:[%s242 + $0xe4] sm:$0xf]
        %v351 = vld [vmem:[%s242 + $0xe8] sm:$0xf]
        %v352 = vld [vmem:[%s242 + $0xec] sm:$0xf]
        %v353 = vld [vmem:[%s242 + $0xf0] sm:$0xf]
        %v354 = vld [vmem:[%s242 + $0xf4] sm:$0xf]
        %v355 = vld [vmem:[%s242 + $0xf8] sm:$0xf]
        %v356 = vld [vmem:[%s242 + $0xfc] sm:$0xf]
        %v361 = vunpack.c.l.b16 %v289
        %v362 = vunpack.c.h.b16 %v289
        %v363 = vunpack.c.l.b16 %v290
        %v364 = vunpack.c.h.b16 %v290
        %v365 = vunpack.c.l.b16 %v291
        %v366 = vunpack.c.h.b16 %v291
        %v367 = vunpack.c.l.b16 %v292
        %v368 = vunpack.c.h.b16 %v292
        %v369 = vpack.c.b16 %v365, %v361
        %v370 = vpack.c.b16 %v366, %v362
        %v371 = vpack.c.b16 %v367, %v363
        %v372 = vpack.c.b16 %v368, %v364
        %v441 = vunpack.c.l.b16 %v293
        %v442 = vunpack.c.l.b16 %v294
        %v443 = vunpack.c.l.b16 %v295
        %v444 = vunpack.c.l.b16 %v296
        %v445 = vunpack.c.l.b16 %v297
        %v446 = vunpack.c.l.b16 %v298
        %v447 = vunpack.c.l.b16 %v299
        %v448 = vunpack.c.l.b16 %v300
        %v449 = vunpack.c.l.b16 %v301
        %v450 = vunpack.c.l.b16 %v302
        %v451 = vunpack.c.l.b16 %v303
        %v452 = vunpack.c.l.b16 %v304
        %v453 = vunpack.c.l.b16 %v305
        %v454 = vunpack.c.l.b16 %v306
        %v455 = vunpack.c.l.b16 %v307
        %v456 = vunpack.c.l.b16 %v308
        %v457 = vunpack.c.l.b16 %v309
        %v458 = vunpack.c.l.b16 %v310
        %v459 = vunpack.c.l.b16 %v311
        %v460 = vunpack.c.l.b16 %v312
        %v461 = vunpack.c.l.b16 %v313
        %v462 = vunpack.c.l.b16 %v314
        %v463 = vunpack.c.l.b16 %v315
        %v464 = vunpack.c.l.b16 %v316
        %v465 = vunpack.c.l.b16 %v317
        %v466 = vunpack.c.l.b16 %v318
        %v467 = vunpack.c.l.b16 %v319
        %v468 = vunpack.c.l.b16 %v320
        %v469 = vunpack.c.l.b16 %v321
        %v470 = vunpack.c.l.b16 %v322
        %v471 = vunpack.c.l.b16 %v323
        %v472 = vunpack.c.l.b16 %v324
        %v473 = vunpack.c.l.b16 %v325
        %v474 = vunpack.c.l.b16 %v326
        %v475 = vunpack.c.l.b16 %v327
        %v476 = vunpack.c.l.b16 %v328
        %v477 = vunpack.c.l.b16 %v329
        %v478 = vunpack.c.l.b16 %v330
        %v479 = vunpack.c.l.b16 %v331
        %v480 = vunpack.c.l.b16 %v332
        %v481 = vunpack.c.l.b16 %v333
        %v482 = vunpack.c.l.b16 %v334
        %v483 = vunpack.c.l.b16 %v335
        %v484 = vunpack.c.l.b16 %v336
        %v485 = vunpack.c.l.b16 %v337
        %v486 = vunpack.c.l.b16 %v338
        %v487 = vunpack.c.l.b16 %v339
        %v488 = vunpack.c.l.b16 %v340
        %v489 = vunpack.c.l.b16 %v341
        %v490 = vunpack.c.l.b16 %v342
        %v491 = vunpack.c.l.b16 %v343
        %v492 = vunpack.c.l.b16 %v344
        %v493 = vunpack.c.l.b16 %v345
        %v494 = vunpack.c.l.b16 %v346
        %v495 = vunpack.c.l.b16 %v347
        %v496 = vunpack.c.l.b16 %v348
        %v497 = vunpack.c.l.b16 %v349
        %v498 = vunpack.c.l.b16 %v350
        %v499 = vunpack.c.l.b16 %v351
        %v500 = vunpack.c.l.b16 %v352
        %v501 = vunpack.c.l.b16 %v353
        %v502 = vunpack.c.l.b16 %v354
        %v503 = vunpack.c.l.b16 %v355
        %v504 = vunpack.c.l.b16 %v356
        %v505 = vpack.c.b16 %v442, %v441
        %v506 = vpack.c.b16 %v444, %v443
        %v507 = vpack.c.b16 %v446, %v445
        %v508 = vpack.c.b16 %v448, %v447
        %v509 = vpack.c.b16 %v450, %v449
        %v510 = vpack.c.b16 %v452, %v451
        %v511 = vpack.c.b16 %v454, %v453
        %v512 = vpack.c.b16 %v456, %v455
        %v513 = vpack.c.b16 %v458, %v457
        %v514 = vpack.c.b16 %v460, %v459
        %v515 = vpack.c.b16 %v462, %v461
        %v516 = vpack.c.b16 %v464, %v463
        %v517 = vpack.c.b16 %v466, %v465
        %v518 = vpack.c.b16 %v468, %v467
        %v519 = vpack.c.b16 %v470, %v469
        %v520 = vpack.c.b16 %v472, %v471
        %v521 = vpack.c.b16 %v474, %v473
        %v522 = vpack.c.b16 %v476, %v475
        %v523 = vpack.c.b16 %v478, %v477
        %v524 = vpack.c.b16 %v480, %v479
        %v525 = vpack.c.b16 %v482, %v481
        %v526 = vpack.c.b16 %v484, %v483
        %v527 = vpack.c.b16 %v486, %v485
        %v528 = vpack.c.b16 %v488, %v487
        %v529 = vpack.c.b16 %v490, %v489
        %v530 = vpack.c.b16 %v492, %v491
        %v531 = vpack.c.b16 %v494, %v493
        %v532 = vpack.c.b16 %v496, %v495
        %v533 = vpack.c.b16 %v498, %v497
        %v534 = vpack.c.b16 %v500, %v499
        %v535 = vpack.c.b16 %v502, %v501
        %v536 = vpack.c.b16 %v504, %v503
        %569 = vmatpush.bf16.msra.mxu0 %v512
        %570 = vmatpush.bf16.msra.mxu0 %v511
        %571 = vmatpush.bf16.msra.mxu0 %v510
        %572 = vmatpush.bf16.msra.mxu0 %v509
        %573 = vmatpush.bf16.msra.mxu0 %v508
        %574 = vmatpush.bf16.msra.mxu0 %v507
        %575 = vmatpush.bf16.msra.mxu0 %v506
        %576 = vmatpush.bf16.msra.mxu0 %v505
        %577 = vmatmul.bf16.gmra.mxu0 %v369
        %v578 = vpop.f32.mrf.mxu0
        %v579 = vadd.f32 0.0, %v578
        %v580 = vpop.f32.mrf.mxu0
        %v581 = vadd.f32 0.0, %v580
        %582 = vdwg.mxu0
        %583 = vmatpush.bf16.msra.mxu0 %v520
        %584 = vmatpush.bf16.msra.mxu0 %v519
        %585 = vmatpush.bf16.msra.mxu0 %v518
        %586 = vmatpush.bf16.msra.mxu0 %v517
        %587 = vmatpush.bf16.msra.mxu0 %v516
        %588 = vmatpush.bf16.msra.mxu0 %v515
        %589 = vmatpush.bf16.msra.mxu0 %v514
        %590 = vmatpush.bf16.msra.mxu0 %v513
        %591 = vmatmul.bf16.gmra.mxu0 %v370
        %v592 = vpop.f32.mrf.mxu0
        %v593 = vadd.f32 %v579, %v592
        %v594 = vpop.f32.mrf.mxu0
        %v595 = vadd.f32 %v581, %v594
        %596 = vdwg.mxu0
        %597 = vmatpush.bf16.msra.mxu0 %v528
        %598 = vmatpush.bf16.msra.mxu0 %v527
        %599 = vmatpush.bf16.msra.mxu0 %v526
        %600 = vmatpush.bf16.msra.mxu0 %v525
        %601 = vmatpush.bf16.msra.mxu0 %v524
        %602 = vmatpush.bf16.msra.mxu0 %v523
        %603 = vmatpush.bf16.msra.mxu0 %v522
        %604 = vmatpush.bf16.msra.mxu0 %v521
        %605 = vmatmul.bf16.gmra.mxu0 %v371
        %v606 = vpop.f32.mrf.mxu0
        %v607 = vadd.f32 %v593, %v606
        %v608 = vpop.f32.mrf.mxu0
        %v609 = vadd.f32 %v595, %v608
        %610 = vdwg.mxu0
        %611 = vmatpush.bf16.msra.mxu0 %v536
        %612 = vmatpush.bf16.msra.mxu0 %v535
        %613 = vmatpush.bf16.msra.mxu0 %v534
        %614 = vmatpush.bf16.msra.mxu0 %v533
        %615 = vmatpush.bf16.msra.mxu0 %v532
        %616 = vmatpush.bf16.msra.mxu0 %v531
        %617 = vmatpush.bf16.msra.mxu0 %v530
        %618 = vmatpush.bf16.msra.mxu0 %v529
        %619 = vmatmul.bf16.gmra.mxu0 %v372
        %v620 = vpop.f32.mrf.mxu0
        %v621 = vadd.f32 %v607, %v620
        %v622 = vpop.f32.mrf.mxu0
        %v623 = vadd.f32 %v609, %v622
        %624 = vdwg.mxu0
        %v625 = vadd.f32 %v287, %v621
        %v626 = vadd.f32 %v288, %v623
        %627 = vst [vmem:[%s273] sm:$0xff] %v625
        %628 = vst [vmem:[%s273 + $0x8] sm:$0xff] %v626
        %p629 = scmp.eq.s32.totalorder %s28, 0
        %p630 = pnand %p281, %p629
        %p631 = pneg %p630
        // Predicated region
        $region45: #{tpu_custom_call.1} parent=31 // pred_check
          _
        $region46: #{tpu_custom_call.1} parent=31 // pred_check_branch
          %633 = sbr.rel (%p630) target = $region48
        $region47: #{tpu_custom_call.1} parent=31 // pred_region
          %v634 = vld [vmem:[%s273] sm:$0xff]
          %v635 = vld [vmem:[%s273 + $0x8] sm:$0xff]
          %v636 = vld [vmem:[%s280] sm:$0x1]
          %v638 = vperm.slane %v636, 0
          %v640 = vadd.f32 %v634, %v638
          %v641 = vadd.f32 %v635, %v638
          %642 = vst [vmem:[%s273] sm:$0xff] %v640
          %643 = vst [vmem:[%s273 + $0x8] sm:$0xff] %v641
        $region48: #{tpu_custom_call.1} parent=31 // pred_fallthru
          _
        %s644 = sand.u32 %s136, 1
        %s645 = scalar_lea.sflag [#allocation4], %s644
        %s646 = sand.u32 %s136, 1
        %s647 = smul.addr %s646, 16
        %s648 = scalar_lea.vmem [#allocation7], %s647
        // Predicated region
        $region49: #{tpu_custom_call.1} parent=31 // pred_check
          %p649 = pneg %p146
        $region50: #{tpu_custom_call.1} parent=31 // pred_check_branch
          %651 = sbr.rel (%p649) target = $region52
        $region51: #{tpu_custom_call.1} parent=31 // pred_region
          %653 = vsyncadd %s645, 0
          %s654 = smul.addr %s28, 2
          %s655 = sadd.s32 %s29, %s654
          %s656 = smul.addr %s655, 8
          %s657 = scalar_lea.hbm %s3, %s656
          %s658 = sshll.u32 %s648, 4
          %s659 = int_to_ptr.vmem [resolvable:$true] %s658
          %s660 = sshll.u32 %s657, 4
          %s661 = int_to_ptr.hbm [resolvable:$true] %s660
          %666 = dma.vmem_to_hbm [thread:$0]  %s659, 256, %s661, %s645, 128, 128, 8
        $region52: #{tpu_custom_call.1} parent=31 // pred_fallthru
          _
      $region32: #{tpu_custom_call.1} parent=5 // pred_fallthru
        _
      %p667 = scmp.le.s32.totalorder 2, %s18
      // Predicated region
      $region53: #{tpu_custom_call.1} parent=5 // pred_check
        %p668 = pneg %p667
      $region54: #{tpu_custom_call.1} parent=5 // pred_check_branch
        %670 = sbr.rel (%p668) target = $region56
      $region55: #{tpu_custom_call.1} parent=5 // pred_region
        %s671 = ssub.s32 %s18, 2
        // Predicated region
        $region57: #{tpu_custom_call.1} parent=55 // pred_check
          %p672 = pneg %p152
        $region58: #{tpu_custom_call.1} parent=55 // pred_check_branch
          %674 = sbr.rel (%p672) target = $region60
        $region59: #{tpu_custom_call.1} parent=55 // pred_region
          %s675 = sand.u32 %s137, 1
          %s676 = scalar_lea.sflag [#allocation4], %s675
          %s677 = sand.u32 %s137, 1
          %s678 = smul.addr %s677, 16
          %s679 = scalar_lea.vmem [#allocation7], %s678
          %681 = dma.done %s676, 256
        $region60: #{tpu_custom_call.1} parent=55 // pred_fallthru
          _
      $region56: #{tpu_custom_call.1} parent=5 // pred_fallthru
        _
    $region6: #{tpu_custom_call.1} parent=1 // loop_footer
      %s22 = sadd.s32 1, %s18
    $region7: #{tpu_custom_call.1} parent=1 // loop_footer_branch
      %17 = sbr.rel target = $region3
    $region8: #{tpu_custom_call.1} parent=1 // loop_exit
      _
    %682 = vsyncpa [#allocation3], 1
    %s683 = scalar_lea.sflag [#allocation3], 1
    %684 = vsyncpa %s683, 1
    %685 = vsyncpa [#allocation6], 1
    %s686 = scalar_lea.sflag [#allocation6], 1
    %687 = vsyncpa %s686, 1
    %688 = vsyncpa [#allocation4], 1
    %s689 = scalar_lea.sflag [#allocation4], 1
    %690 = vsyncpa %s689, 1

</llo_original>
